<compile_context>
chip_gen: v6e
topology: v6e:2x2x1
jax: 0.10.0
libtpu: 0.0.40
codegen_flags: <defaults>
</compile_context>

<pallas_src>
import functools

import jax
import jax.numpy as jnp
from jax.experimental import pallas as pl
from jax.experimental.pallas import tpu as pltpu


def make_positional_encoding(max_position: int, emb_dim: int) -> jnp.ndarray:
    """Deterministic sin/cos PE table, shape (1, max_position, emb_dim), float32."""
    position = jnp.arange(max_position, dtype=jnp.float32)[:, None]           # (P, 1)
    _2i = jnp.arange(0, emb_dim, 2, dtype=jnp.float32)                         # (E/2,)
    angle = position / jnp.power(10000.0, _2i / emb_dim)                       # (P, E/2)
    pe = jnp.zeros((max_position, emb_dim), dtype=jnp.float32)
    pe = pe.at[:, 0::2].set(jnp.sin(angle))
    pe = pe.at[:, 1::2].set(jnp.cos(angle))
    return pe[None, :, :]                                                      # (1, P, E)


# ----------------------------------------------------------------------------- kernels

def _posenc_eval_kernel(x_ref, pe_ref, o_ref):
    # x_ref: (tb, ts, E); pe_ref: (1, ts, E) -> broadcasts over the batch-tile dim.
    o_ref[...] = (x_ref[...] + pe_ref[...]).astype(o_ref.dtype)


def _posenc_dropout_kernel(x_ref, pe_ref, bits_ref, o_ref, *, threshold, scale):
    # Inverted dropout via integer threshold: keep prob = 1 - p, kept values scaled 1/(1-p).
    y = x_ref[...] + pe_ref[...]
    keep = bits_ref[...] >= jnp.uint32(threshold)
    o_ref[...] = (y * jnp.where(keep, jnp.float32(scale), jnp.float32(0.0))).astype(o_ref.dtype)


# ----------------------------------------------------------------------------- tiling

def _pick_tiles(B, S, E, itemsize, n_big_streams, *, budget_bytes=12 << 20, target_rows=512):
    """Pick (tile_b, tile_s).

    Working set ~= 2 (double-buffer) * [n_big_streams * tile_b*tile_s + 1 (PE) * tile_s] rows
    of E*itemsize bytes; keep it under `budget_bytes` (conservative across v5e/v6e/v7x).
    tile_s is either the full S or a multiple of 8 (TPU sublane constraint).
    """
    bytes_per_row = max(1, E * itemsize)
    max_rows = max(8, budget_bytes // (2 * (n_big_streams + 1) * bytes_per_row))
    rows = min(target_rows, max_rows)
    if S <= rows:
        tile_s = S                                  # full seq dim -> always legal
        tile_b = min(B, max(1, rows // max(S, 1)))  # fuse batch rows when S is small
    else:
        tile_s = max(8, (rows // 8) * 8)            # multiple of 8; last block padded/masked
        tile_b = 1
    return tile_b, tile_s


# ----------------------------------------------------------------------------- wrapper

def positional_encoding_forward(x, pe_table, *, dropout_p=0.1, training=False, rng_key=None):
    """x: (B, S, E). pe_table: (1, max_position, E) with max_position >= S. Returns (B, S, E)."""
    B, S, E = x.shape
    assert pe_table.shape[1] >= S, "seq_len exceeds max_position"
    # TODO(synk): if E % 128 != 0, pad E to a multiple of 128 for lane-dense (unmasked) stores.

    use_dropout = bool(training) and float(dropout_p) > 0.0
    n_big = 3 if use_dropout else 2                 # x, out (+ bits when training)
    tile_b, tile_s = _pick_tiles(B, S, E, jnp.dtype(x.dtype).itemsize, n_big)

    grid = (pl.cdiv(S, tile_s), pl.cdiv(B, tile_b))          # seq outer, batch inner
    x_spec = pl.BlockSpec((tile_b, tile_s, E), lambda si, bi: (bi, si, 0))
    pe_spec = pl.BlockSpec((1, tile_s, E), lambda si, bi: (0, si, 0))   # constant across bi
    out_spec = pl.BlockSpec((tile_b, tile_s, E), lambda si, bi: (bi, si, 0))
    cparams = pltpu.CompilerParams(dimension_semantics=("parallel", "parallel"))

    if not use_dropout:
        return pl.pallas_call(
            _posenc_eval_kernel,
            out_shape=jax.ShapeDtypeStruct((B, S, E), x.dtype),
            grid=grid,
            in_specs=[x_spec, pe_spec],
            out_specs=out_spec,
            compiler_params=cparams,
        )(x, pe_table)

    # Training path: Bernoulli(1-p) keep mask via uint32 threshold compare.
    # NOTE: RNG stream cannot bit-match torch.nn.Dropout; semantics (keep prob, 1/(1-p) scale)
    # are preserved.
    if rng_key is None:
        rng_key = jax.random.PRNGKey(0)
    bits = jax.random.bits(rng_key, (B, S, E), dtype=jnp.uint32)
    threshold = min(int(round(float(dropout_p) * (2 ** 32))), 2 ** 32 - 1)   # clamp p ~ 1.0
    scale = 1.0 / (1.0 - float(dropout_p))
    kernel = functools.partial(_posenc_dropout_kernel, threshold=threshold, scale=scale)

    return pl.pallas_call(
        kernel,
        out_shape=jax.ShapeDtypeStruct((B, S, E), x.dtype),
        grid=grid,
        in_specs=[x_spec, pe_spec, x_spec],         # bits shares x's tiling
        out_specs=out_spec,
        compiler_params=cparams,
    )(x, pe_table, bits)


# ----------------------------------------------------------------------------- demo / check

if __name__ == "__main__":
    # Small shapes consistent with the module (emb_dim kept a multiple of 128 for lane density).
    B, S, E = 2, 16, 256
    MAX_POS = 32
    P_DROP = 0.1

    key = jax.random.PRNGKey(0)
    kx, kd = jax.random.split(key)
    x = jax.random.normal(kx, (B, S, E), dtype=jnp.float32)
    pe_table = make_positional_encoding(MAX_POS, E)
    ref = x + pe_table[:, :S, :]

    # Eval-mode forward (dropout is identity) — deterministic, checkable.
    out = positional_encoding_forward(x, pe_table, dropout_p=P_DROP, training=False)
    out = jax.block_until_ready(out)
    assert jnp.allclose(out, ref, atol=1e-6), "eval-mode mismatch vs reference"

    # Training-mode forward (in-kernel inverted dropout) — structural check:
    # every element is either 0 (dropped) or the reference value scaled by 1/(1-p).
    out_tr = positional_encoding_forward(x, pe_table, dropout_p=P_DROP, training=True, rng_key=kd)
    out_tr = jax.block_until_ready(out_tr)
    scaled = ref * (1.0 / (1.0 - P_DROP))
    ok = jnp.all((out_tr == 0.0) | (jnp.abs(out_tr - scaled) <= 1e-4))
    assert bool(ok), "training-mode dropout structure mismatch"

    print("KERNEL_OK")
</pallas_src>

<mosaic_0001>
module attributes {stable_mosaic.version = 11 : i64} {
  func.func @_posenc_eval_kernel(%arg0: i32, %arg1: i32, %arg2: memref<2x16x256xf32, #tpu.memory_space<vmem>>, %arg3: memref<1x16x256xf32, #tpu.memory_space<vmem>>, %arg4: memref<2x16x256xf32, #tpu.memory_space<vmem>>) attributes {dimension_semantics = [#tpu.dimension_semantics<parallel>, #tpu.dimension_semantics<parallel>], iteration_bounds = array<i64: 1, 1>, scalar_prefetch = 0 : i64, scratch_operands = 0 : i64, tpu.core_type = #tpu.core_type<tc>, window_params = [{transform_indices = @transform_0, window_bounds = array<i64: 2, 16, 256>}, {transform_indices = @transform_1, window_bounds = array<i64: 1, 16, 256>}, {transform_indices = @transform_2, window_bounds = array<i64: 2, 16, 256>}]} {
    %c0 = arith.constant 0 : index
    %c0_0 = arith.constant 0 : index
    %c0_1 = arith.constant 0 : index
    %0 = vector.load %arg2[%c0, %c0_0, %c0_1] : memref<2x16x256xf32, #tpu.memory_space<vmem>>, vector<2x16x256xf32>
    %c0_2 = arith.constant 0 : index
    %c0_3 = arith.constant 0 : index
    %c0_4 = arith.constant 0 : index
    %1 = vector.load %arg3[%c0_2, %c0_3, %c0_4] : memref<1x16x256xf32, #tpu.memory_space<vmem>>, vector<1x16x256xf32>
    %2 = vector.broadcast %1 : vector<1x16x256xf32> to vector<2x16x256xf32>
    %3 = arith.addf %0, %2 : vector<2x16x256xf32>
    %c0_5 = arith.constant 0 : index
    %c0_6 = arith.constant 0 : index
    %c0_7 = arith.constant 0 : index
    %4 = vector.load %arg4[%c0_5, %c0_6, %c0_7] : memref<2x16x256xf32, #tpu.memory_space<vmem>>, vector<2x16x256xf32>
    tpu.vector_store %arg4[%c0_5, %c0_6, %c0_7], %3 {strides = array<i32>} : memref<2x16x256xf32, #tpu.memory_space<vmem>>, vector<2x16x256xf32>,
    return
  }
  func.func @transform_0(%arg0: i32, %arg1: i32) -> (i32, i32, i32) {
    %c0_i32 = arith.constant 0 : i32
    %c0_i32_0 = arith.constant 0 : i32
    return %arg1, %arg0, %c0_i32 : i32, i32, i32
  }
  func.func @transform_1(%arg0: i32, %arg1: i32) -> (i32, i32, i32) {
    %c0_i32 = arith.constant 0 : i32
    %c0_i32_0 = arith.constant 0 : i32
    %c0_i32_1 = arith.constant 0 : i32
    return %c0_i32, %arg0, %c0_i32_0 : i32, i32, i32
  }
  func.func @transform_2(%arg0: i32, %arg1: i32) -> (i32, i32, i32) {
    %c0_i32 = arith.constant 0 : i32
    %c0_i32_0 = arith.constant 0 : i32
    return %arg1, %arg0, %c0_i32 : i32, i32, i32
  }
}

</mosaic_0001>

<llo_original>
// kernel: tpu_custom_call.1
$region0: #{tpu_custom_call.1}
  #allocation0 [shape = 'u32[]', space=smem, size = 0x4, offset = 0x4, fixed_abs, tag = 'smem constant byte address 0x4 - core index']
  #allocation1 [shape = 'u32[144,128]{1,0:T(1,128)}', space=vmem, size = 0x12000, scoped, tag = 'internal scratch']
  %s0 = inlined_call_operand.hbm [shape: f32[2,16,256], index: 0, kind: input, shape index: {}]
  %s1 = inlined_call_operand.hbm [shape: f32[1,32,256], index: 1, kind: input, shape index: {}]
  %s2 = inlined_call_operand.hbm [shape: f32[2,16,256], index: 2, kind: output, shape index: {}]
  %s3 = sld [smem:[#allocation0]]
  $region26: #{tpu_custom_call.1} parent=0
    _
  %s5 = ssub.s32 1, %s3
  %s6 = scalar_select 0, %s5, %s3
  $region1: #{tpu_custom_call.1} parent=0
    #allocation2 [shape = 'u8[32768]{0}', space=vmem, size = 0x8000, scoped, tag = 'input window, operand 0, single buffered']
    #allocation3 [shape = 's32[1]{0}', space=sflag, size = 0x4, scoped, tag = 'scoped memory for tpu_custom_call.1']
    #allocation4 [shape = 's32[1]{0}', space=sflag, size = 0x4, scoped, tag = 'scoped memory for tpu_custom_call.1']
    #allocation5 [shape = 'u8[16384]{0}', space=vmem, size = 0x4000, scoped, tag = 'input window, operand 1, single buffered']
    #allocation6 [shape = 's32[1]{0}', space=sflag, size = 0x4, scoped, tag = 'scoped memory for tpu_custom_call.1']
    #allocation7 [shape = 'u8[32768]{0}', space=vmem, size = 0x8000, scoped, tag = 'output window, operand 0, single buffered']
    %7 = vsyncpa [#allocation3], 0
    %8 = vsyncpa [#allocation6], 0
    %9 = vsyncpa [#allocation4], 0
    // Predicated region
    $region2: #{tpu_custom_call.1} parent=1 // pred_check
      _
    $region3: #{tpu_custom_call.1} parent=1 // pred_check_branch
      %11 = sbr.rel (0) target = $region5
    $region4: #{tpu_custom_call.1} parent=1 // pred_region
      %s13 = ssub.s32 1024, 1024
      %14 = vsyncadd [#allocation3], %s13
      %s15 = sshll.u32 [#allocation2], 4
      %s16 = int_to_ptr.vmem [resolvable:$true] %s15
      %21 = dma.hbm_to_vmem [thread:$0]  %s0, 1024, %s16, [#allocation3], 256, 256, 16
    $region5: #{tpu_custom_call.1} parent=1 // pred_fallthru
      _
    // Predicated region
    $region6: #{tpu_custom_call.1} parent=1 // pred_check
      _
    $region7: #{tpu_custom_call.1} parent=1 // pred_check_branch
      %23 = sbr.rel (0) target = $region9
    $region8: #{tpu_custom_call.1} parent=1 // pred_region
      %s25 = ssub.s32 512, 512
      %26 = vsyncadd [#allocation6], %s25
      %s27 = sshll.u32 [#allocation5], 4
      %s28 = int_to_ptr.vmem [resolvable:$true] %s27
      %33 = dma.hbm_to_vmem [thread:$0]  %s1, 512, %s28, [#allocation6], 256, 256, 16
    $region9: #{tpu_custom_call.1} parent=1 // pred_fallthru
      _
    // Predicated region
    $region10: #{tpu_custom_call.1} parent=1 // pred_check
      _
    $region11: #{tpu_custom_call.1} parent=1 // pred_check_branch
      %35 = sbr.rel (0) target = $region13
    $region12: #{tpu_custom_call.1} parent=1 // pred_region
      %36 = dma.done [#allocation3], 1024
    $region13: #{tpu_custom_call.1} parent=1 // pred_fallthru
      _
    // Predicated region
    $region14: #{tpu_custom_call.1} parent=1 // pred_check
      _
    $region15: #{tpu_custom_call.1} parent=1 // pred_check_branch
      %38 = sbr.rel (0) target = $region17
    $region16: #{tpu_custom_call.1} parent=1 // pred_region
      %39 = dma.done [#allocation6], 512
    $region17: #{tpu_custom_call.1} parent=1 // pred_fallthru
      _
    %v40 = vld [vmem:[#allocation2] sm:$0xff]
    %v41 = vld [vmem:[#allocation2 + $0x8] sm:$0xff]
    %v42 = vld [vmem:[#allocation2 + $0x10] sm:$0xff]
    %v43 = vld [vmem:[#allocation2 + $0x18] sm:$0xff]
    %v44 = vld [vmem:[#allocation2 + $0x20] sm:$0xff]
    %v45 = vld [vmem:[#allocation2 + $0x28] sm:$0xff]
    %v46 = vld [vmem:[#allocation2 + $0x30] sm:$0xff]
    %v47 = vld [vmem:[#allocation2 + $0x38] sm:$0xff]
    %v48 = vld [vmem:[#allocation5] sm:$0xff]
    %v49 = vld [vmem:[#allocation5 + $0x8] sm:$0xff]
    %v50 = vld [vmem:[#allocation5 + $0x10] sm:$0xff]
    %v51 = vld [vmem:[#allocation5 + $0x18] sm:$0xff]
    %v52 = vadd.f32 %v40, %v48
    %v53 = vadd.f32 %v41, %v49
    %v54 = vadd.f32 %v42, %v50
    %v55 = vadd.f32 %v43, %v51
    %v56 = vadd.f32 %v44, %v48
    %v57 = vadd.f32 %v45, %v49
    %v58 = vadd.f32 %v46, %v50
    %v59 = vadd.f32 %v47, %v51
    %60 = vst [vmem:[#allocation7] sm:$0xff] %v52
    %61 = vst [vmem:[#allocation7 + $0x8] sm:$0xff] %v53
    %62 = vst [vmem:[#allocation7 + $0x10] sm:$0xff] %v54
    %63 = vst [vmem:[#allocation7 + $0x18] sm:$0xff] %v55
    %64 = vst [vmem:[#allocation7 + $0x20] sm:$0xff] %v56
    %65 = vst [vmem:[#allocation7 + $0x28] sm:$0xff] %v57
    %66 = vst [vmem:[#allocation7 + $0x30] sm:$0xff] %v58
    %67 = vst [vmem:[#allocation7 + $0x38] sm:$0xff] %v59
    // Predicated region
    $region18: #{tpu_custom_call.1} parent=1 // pred_check
      _
    $region19: #{tpu_custom_call.1} parent=1 // pred_check_branch
      %69 = sbr.rel (0) target = $region21
    $region20: #{tpu_custom_call.1} parent=1 // pred_region
      %s71 = ssub.s32 1024, 1024
      %72 = vsyncadd [#allocation4], %s71
      %s73 = sshll.u32 [#allocation7], 4
      %s74 = int_to_ptr.vmem [resolvable:$true] %s73
      %79 = dma.vmem_to_hbm [thread:$0]  %s74, 1024, %s2, [#allocation4], 256, 256, 16
    $region21: #{tpu_custom_call.1} parent=1 // pred_fallthru
      _
    // Predicated region
    $region22: #{tpu_custom_call.1} parent=1 // pred_check
      _
    $region23: #{tpu_custom_call.1} parent=1 // pred_check_branch
      %81 = sbr.rel (0) target = $region25
    $region24: #{tpu_custom_call.1} parent=1 // pred_region
      %82 = dma.done [#allocation4], 1024
    $region25: #{tpu_custom_call.1} parent=1 // pred_fallthru
      _
    %83 = vsyncpa [#allocation3], 1
    %84 = vsyncpa [#allocation6], 1
    %85 = vsyncpa [#allocation4], 1

</llo_original>
